<compile_context>
chip_gen: v6e
topology: v6e:2x2x1
jax: 0.10.0
libtpu: 0.0.40
codegen_flags: <defaults>
</compile_context>

<pallas_src>
import jax
import jax.numpy as jnp
from jax import lax
from jax.experimental import pallas as pl
from jax.experimental.pallas import tpu as pltpu


_VMEM_TILE_BUDGET = 20 << 20   # resident bytes/step target (v7x-safe, <32 MiB)
_VMEM_LIMIT_BYTES = 32 << 20   # explicit scoped-VMEM limit (>= per-gen needs)
_SINGLE_TILE_MAX_B = 256       # below this, one full-array tile (no padding)


def oneclass_kernel(x_ref, we1t_ref, be1c_ref, we2a_ref, b_ref, out_ref):
    # x tile: (TILE_B, F) bf16; We1^T: (H, F) bf16.  Contract both over their
    # last (F) dim -> (H, TILE_B): batch lands in the lane dim with no
    # materialized on-chip transpose of x.                              [MXU]
    h = lax.dot_general(
        we1t_ref[...], x_ref[...],
        dimension_numbers=(((1,), (1,)), ((), ())),
        preferred_element_type=jnp.float32)
    h = jnp.maximum(h + be1c_ref[...], 0.0)             # (H, TILE_B) f32  [VPU]
    # a * (We2 . h) via MXU: (1, H) @ (H, TILE_B) -> (1, TILE_B); the collapsed
    # classifier scale `a` is pre-folded into We2, so this IS the logit up to +b.
    logit = jnp.dot(we2a_ref[...], h, preferred_element_type=jnp.float32)
    logit = logit + b_ref[0, 0]                         # scalar bias from SMEM
    # Exact sigmoid: logit is only (1, TILE_B) -> EUP cost negligible.
    out_ref[...] = jax.nn.sigmoid(logit)


def _round_up(n, m):
    return ((n + m - 1) // m) * m


def _choose_tile_b(B, F, H):
    """VMEM-budget-driven batch tile size (rows)."""
    if B <= _SINGLE_TILE_MAX_B:
        # One full-array tile: block == full array satisfies the (8,128) rule
        # without padding the batch up to a multiple of 128.
        return _round_up(B, 8)
    # Resident bytes per batch row per grid step:
    #   2 * (F*2)  double-buffered bf16 x block
    #   2 * 4      double-buffered f32 (1, tile_b) output block
    #   H * 4      f32 (H, tile_b) hidden intermediate
    bytes_per_row = 2 * (F * 2) + 2 * 4 + H * 4
    tile_b = (_VMEM_TILE_BUDGET // bytes_per_row) // 128 * 128
    tile_b = max(tile_b, 128)
    # Guarantee >= 2 grid steps so the "parallel" batch axis can shard across
    # both v7x TensorCores (and bound the batch-padding overhead).
    half = _round_up((B + 1) // 2, 128)
    return min(tile_b, half)


def oneclass_forward(x, params):
    """Fused OneClass forward.  x: (B, F) f32 -> (B, 1) probabilities."""
    (we1, be1, we2, be2, wc1, bc1, wc2, bc2) = params
    B, F = x.shape
    H = we1.shape[1]

    # ---- collapse the Linear(1,100)->Linear(100,1) classifier (exact) ----
    a = jnp.sum(wc1 * wc2)                                     # scalar
    b = a * be2[0, 0] + jnp.sum(bc1 * wc2) + bc2[0, 0]         # scalar (be2 folded)
    we1t = we1.T.astype(jnp.bfloat16)                          # (H, F) streamed bf16
    be1c = be1.reshape(H, 1).astype(jnp.float32)               # (H, 1)
    we2a = (a * we2).reshape(1, H).astype(jnp.float32)         # (1, H), scale folded
    bsc = jnp.reshape(b, (1, 1)).astype(jnp.float32)           # SMEM scalar

    # ---- bf16 streaming of x (hot HBM path); accumulation stays f32 ----
    x = x.astype(jnp.bfloat16)

    # ---- batch tiling: VMEM-budget tiles, pad B to a tile multiple ----
    tile_b = _choose_tile_b(B, F, H)
    b_padded = _round_up(B, tile_b)
    if b_padded != B:
        x = jnp.pad(x, ((0, b_padded - B), (0, 0)))
    num_tiles = b_padded // tile_b

    out_row = pl.pallas_call(
        oneclass_kernel,
        out_shape=jax.ShapeDtypeStruct((1, b_padded), jnp.float32),
        grid=(num_tiles,),
        in_specs=[
            pl.BlockSpec((tile_b, F), lambda i: (i, 0)),               # x: streamed
            pl.BlockSpec((H, F), lambda i: (0, 0)),                    # We1^T: resident
            pl.BlockSpec((H, 1), lambda i: (0, 0)),                    # be1 column
            pl.BlockSpec((1, H), lambda i: (0, 0)),                    # a * We2 row
            pl.BlockSpec(memory_space=pltpu.MemorySpace.SMEM),         # scalar b
        ],
        out_specs=pl.BlockSpec((1, tile_b), lambda i: (0, i)),         # lane-dense row
        compiler_params=pltpu.CompilerParams(
            dimension_semantics=("parallel",),
            vmem_limit_bytes=_VMEM_LIMIT_BYTES),
    )(x, we1t, be1c, we2a, bsc)

    # back to the module's (B, 1) column layout; drop batch padding.
    return out_row.reshape(b_padded, 1)[:B]


def make_params(key, features, hidden):
    ks = jax.random.split(key, 8)
    s = 0.1
    we1 = s * jax.random.normal(ks[0], (features, hidden), jnp.float32)  # energy L1 (in, out)
    be1 = s * jax.random.normal(ks[1], (1, hidden), jnp.float32)
    we2 = s * jax.random.normal(ks[2], (1, hidden), jnp.float32)         # energy L2 (row of (H,1))
    be2 = s * jax.random.normal(ks[3], (1, 1), jnp.float32)
    wc1 = s * jax.random.normal(ks[4], (1, 100), jnp.float32)            # Linear(1,100) weight.T
    bc1 = s * jax.random.normal(ks[5], (1, 100), jnp.float32)
    wc2 = s * jax.random.normal(ks[6], (1, 100), jnp.float32)            # Linear(100,1) weight (row)
    bc2 = s * jax.random.normal(ks[7], (1, 1), jnp.float32)
    return (we1, be1, we2, be2, wc1, bc1, wc2, bc2)


def reference_forward(x, params):
    # pure-JAX f32 reference with the UNcollapsed classifier (module semantics)
    (we1, be1, we2, be2, wc1, bc1, wc2, bc2) = params
    h = jnp.maximum(x @ we1 + be1, 0.0)
    energy = jnp.sum(h * we2, axis=-1, keepdims=True) + be2
    c1 = energy * wc1 + bc1
    logit = jnp.sum(c1 * wc2, axis=-1, keepdims=True) + bc2
    return jax.nn.sigmoid(logit)


if __name__ == "__main__":
    key = jax.random.PRNGKey(0)
    kx, kp, kx2 = jax.random.split(key, 3)

    batch, features, hidden = 8, 32, 64
    x = jax.random.normal(kx, (batch, features), jnp.float32)
    params = make_params(kp, features, hidden)

    out = jax.block_until_ready(oneclass_forward(x, params))
    ref = reference_forward(x, params)
    assert out.shape == (batch, 1)
    # tolerance covers the exact classifier collapse (fp reassociation) and
    # bf16 streaming of x / We1 (accumulation is f32).
    assert jnp.allclose(out, ref, atol=5e-3, rtol=5e-3)

    # Exercise the multi-tile grid path (>=2 tiles), batch padding, and the
    # lane-aligned tile size selection.
    batch2 = 300
    x2 = jax.random.normal(kx2, (batch2, features), jnp.float32)
    out2 = jax.block_until_ready(oneclass_forward(x2, params))
    ref2 = reference_forward(x2, params)
    assert out2.shape == (batch2, 1)
    assert jnp.allclose(out2, ref2, atol=5e-3, rtol=5e-3)

    print("KERNEL_OK")
</pallas_src>

<mosaic_0001>
module attributes {stable_mosaic.version = 11 : i64} {
  func.func @oneclass_kernel(%arg0: i32, %arg1: memref<8x32xbf16, #tpu.memory_space<vmem>>, %arg2: memref<64x32xbf16, #tpu.memory_space<vmem>>, %arg3: memref<64x1xf32, #tpu.memory_space<vmem>>, %arg4: memref<1x64xf32, #tpu.memory_space<vmem>>, %arg5: memref<1x1xf32, #tpu.memory_space<smem>>, %arg6: memref<1x8xf32, #tpu.memory_space<vmem>>) attributes {dimension_semantics = [#tpu.dimension_semantics<parallel>], iteration_bounds = array<i64: 1>, scalar_prefetch = 0 : i64, scratch_operands = 0 : i64, tpu.core_type = #tpu.core_type<tc>, window_params = [{transform_indices = @transform_0, window_bounds = array<i64: 8, 32>}, {pipeline_mode = #tpu.pipeline_mode<synchronous>, transform_indices = @transform_1, window_bounds = array<i64: 64, 32>}, {pipeline_mode = #tpu.pipeline_mode<synchronous>, transform_indices = @transform_2, window_bounds = array<i64: 64, 1>}, {pipeline_mode = #tpu.pipeline_mode<synchronous>, transform_indices = @transform_3, window_bounds = array<i64: 1, 64>}, {transform_indices = @transform_4, window_bounds = array<i64: 1, 1>}, {transform_indices = @transform_5, window_bounds = array<i64: 1, 8>}]} {
    %c0 = arith.constant 0 : index
    %c0_0 = arith.constant 0 : index
    %0 = vector.load %arg2[%c0, %c0_0] : memref<64x32xbf16, #tpu.memory_space<vmem>>, vector<64x32xbf16>
    %c0_1 = arith.constant 0 : index
    %c0_2 = arith.constant 0 : index
    %1 = vector.load %arg1[%c0_1, %c0_2] : memref<8x32xbf16, #tpu.memory_space<vmem>>, vector<8x32xbf16>
    %cst = arith.constant dense<0.000000e+00> : vector<64x8xf32>
    %2 = tpu.matmul %0, %1, %cst {dimension_numbers = #tpu.dot_dimension_numbers<[1], [1], [0], [0], [0, 0, 1, 0], [], []>} : vector<64x32xbf16>, vector<8x32xbf16>, vector<64x8xf32> -> vector<64x8xf32>
    %c0_3 = arith.constant 0 : index
    %c0_4 = arith.constant 0 : index
    %3 = vector.load %arg3[%c0_3, %c0_4] : memref<64x1xf32, #tpu.memory_space<vmem>>, vector<64x1xf32>
    %4 = vector.broadcast %3 : vector<64x1xf32> to vector<64x8xf32>
    %5 = arith.addf %2, %4 : vector<64x8xf32>
    %cst_5 = arith.constant 0.000000e+00 : f32
    %6 = vector.broadcast %cst_5 : f32 to vector<64x8xf32>
    %7 = arith.maximumf %5, %6 : vector<64x8xf32>
    %c0_6 = arith.constant 0 : index
    %c0_7 = arith.constant 0 : index
    %8 = vector.load %arg4[%c0_6, %c0_7] : memref<1x64xf32, #tpu.memory_space<vmem>>, vector<1x64xf32>
    %cst_8 = arith.constant dense<0.000000e+00> : vector<1x8xf32>
    %9 = tpu.matmul %8, %7, %cst_8 {dimension_numbers = #tpu.dot_dimension_numbers<[1], [0], [0], [1], [0, 0, 1, 1], [], []>} : vector<1x64xf32>, vector<64x8xf32>, vector<1x8xf32> -> vector<1x8xf32>
    %c0_9 = arith.constant 0 : index
    %c0_10 = arith.constant 0 : index
    %10 = memref.load %arg5[%c0_9, %c0_10] : memref<1x1xf32, #tpu.memory_space<smem>>
    %11 = vector.broadcast %10 : f32 to vector<1x8xf32>
    %12 = arith.addf %9, %11 : vector<1x8xf32>
    %13 = arith.negf %12 : vector<1x8xf32>
    %14 = math.exp %13 : vector<1x8xf32>
    %cst_11 = arith.constant 1.000000e+00 : f32
    %15 = vector.broadcast %cst_11 : f32 to vector<1x8xf32>
    %16 = arith.addf %15, %14 : vector<1x8xf32>
    %17 = arith.divf %15, %16 : vector<1x8xf32>
    %c0_12 = arith.constant 0 : index
    %c0_13 = arith.constant 0 : index
    %18 = vector.load %arg6[%c0_12, %c0_13] : memref<1x8xf32, #tpu.memory_space<vmem>>, vector<1x8xf32>
    tpu.vector_store %arg6[%c0_12, %c0_13], %17 {strides = array<i32>} : memref<1x8xf32, #tpu.memory_space<vmem>>, vector<1x8xf32>,
    return
  }
  func.func @transform_0(%arg0: i32) -> (i32, i32) {
    %c0_i32 = arith.constant 0 : i32
    %c0_i32_0 = arith.constant 0 : i32
    return %arg0, %c0_i32 : i32, i32
  }
  func.func @transform_1(%arg0: i32) -> (i32, i32) {
    %c0_i32 = arith.constant 0 : i32
    %c0_i32_0 = arith.constant 0 : i32
    %c0_i32_1 = arith.constant 0 : i32
    return %c0_i32, %c0_i32_0 : i32, i32
  }
  func.func @transform_2(%arg0: i32) -> (i32, i32) {
    %c0_i32 = arith.constant 0 : i32
    %c0_i32_0 = arith.constant 0 : i32
    %c0_i32_1 = arith.constant 0 : i32
    return %c0_i32, %c0_i32_0 : i32, i32
  }
  func.func @transform_3(%arg0: i32) -> (i32, i32) {
    %c0_i32 = arith.constant 0 : i32
    %c0_i32_0 = arith.constant 0 : i32
    %c0_i32_1 = arith.constant 0 : i32
    return %c0_i32, %c0_i32_0 : i32, i32
  }
  func.func @transform_4(%arg0: i32) -> (i32, i32) {
    %c0_i32 = arith.constant 0 : i32
    %c0_i32_0 = arith.constant 0 : i32
    %c0_i32_1 = arith.constant 0 : i32
    return %c0_i32, %c0_i32_0 : i32, i32
  }
  func.func @transform_5(%arg0: i32) -> (i32, i32) {
    %c0_i32 = arith.constant 0 : i32
    %c0_i32_0 = arith.constant 0 : i32
    return %c0_i32, %arg0 : i32, i32
  }
}

</mosaic_0001>

<llo_original>
// kernel: tpu_custom_call.1
$region0: #{tpu_custom_call.1}
  #allocation0 [shape = 'u32[]', space=smem, size = 0x4, offset = 0x4, fixed_abs, tag = 'smem constant byte address 0x4 - core index']
  #allocation1 [shape = 'u32[144,128]{1,0:T(1,128)}', space=vmem, size = 0x12000, scoped, tag = 'internal scratch']
  #allocation2 [shape = 'f32[1,1]{1,0:T(1,128)S(6)}', space=smem, size = 0x200, scoped, tag = 'scoped memory for tpu_custom_call.1']
  %s0 = inlined_call_operand.vmem [shape: bf16[8,32], index: 0, kind: input, shape index: {}]
  %s1 = inlined_call_operand.vmem [shape: bf16[64,32], index: 1, kind: input, shape index: {}]
  %s2 = inlined_call_operand.vmem [shape: f32[64,1], index: 2, kind: input, shape index: {}]
  %s3 = inlined_call_operand.vmem [shape: f32[1,64], index: 3, kind: input, shape index: {}]
  %s4 = inlined_call_operand.<no memory space> [shape: f32[1,1], index: 4, kind: input, shape index: {}]
  %s5 = inlined_call_operand.hbm [shape: f32[1,8], index: 5, kind: output, shape index: {}]
  %s6 = sld [smem:[#allocation0]]
  $region30: #{tpu_custom_call.1} parent=0
    _
  %s8 = ssub.s32 1, %s6
  %s9 = scalar_select 0, %s8, %s6
  %10 = sst [smem:[#allocation2]] %s4
  $region1: #{tpu_custom_call.1} parent=0
    #allocation3 [shape = 'u8[512]{0}', space=vmem, size = 0x400, scoped, tag = 'output window, operand 0, single buffered']
    #allocation4 [shape = 's32[1]{0}', space=sflag, size = 0x4, scoped, tag = 'scoped memory for tpu_custom_call.1']
    %11 = vsyncpa [#allocation4], 0
    // Predicated region
    $region2: #{tpu_custom_call.1} parent=1 // pred_check
      _
    $region3: #{tpu_custom_call.1} parent=1 // pred_check_branch
      %13 = sbr.rel (0) target = $region5
    $region4: #{tpu_custom_call.1} parent=1 // pred_region
      _
    $region5: #{tpu_custom_call.1} parent=1 // pred_fallthru
      _
    // Predicated region
    $region6: #{tpu_custom_call.1} parent=1 // pred_check
      _
    $region7: #{tpu_custom_call.1} parent=1 // pred_check_branch
      %15 = sbr.rel (0) target = $region9
    $region8: #{tpu_custom_call.1} parent=1 // pred_region
      _
    $region9: #{tpu_custom_call.1} parent=1 // pred_fallthru
      _
    // Predicated region
    $region10: #{tpu_custom_call.1} parent=1 // pred_check
      _
    $region11: #{tpu_custom_call.1} parent=1 // pred_check_branch
      %17 = sbr.rel (0) target = $region13
    $region12: #{tpu_custom_call.1} parent=1 // pred_region
      _
    $region13: #{tpu_custom_call.1} parent=1 // pred_fallthru
      _
    // Predicated region
    $region14: #{tpu_custom_call.1} parent=1 // pred_check
      _
    $region15: #{tpu_custom_call.1} parent=1 // pred_check_branch
      %19 = sbr.rel (0) target = $region17
    $region16: #{tpu_custom_call.1} parent=1 // pred_region
      _
    $region17: #{tpu_custom_call.1} parent=1 // pred_fallthru
      _
    // Predicated region
    $region18: #{tpu_custom_call.1} parent=1 // pred_check
      _
    $region19: #{tpu_custom_call.1} parent=1 // pred_check_branch
      %21 = sbr.rel (0) target = $region21
    $region20: #{tpu_custom_call.1} parent=1 // pred_region
      _
    $region21: #{tpu_custom_call.1} parent=1 // pred_fallthru
      _
    %v23 = vld [vmem:[%s1] sm:$0xf]
    %v24 = vld [vmem:[%s1 + $0x4] sm:$0xf]
    %v25 = vld [vmem:[%s1 + $0x8] sm:$0xf]
    %v26 = vld [vmem:[%s1 + $0xc] sm:$0xf]
    %v27 = vld [vmem:[%s1 + $0x10] sm:$0xf]
    %v28 = vld [vmem:[%s1 + $0x14] sm:$0xf]
    %v29 = vld [vmem:[%s1 + $0x18] sm:$0xf]
    %v30 = vld [vmem:[%s1 + $0x1c] sm:$0xf]
    %v31 = vld [vmem:[%s0] sm:$0xf]
    %v32 = vld [vmem:[%s2] sm:$0xff]
    %v33 = vld [vmem:[%s2 + $0x8] sm:$0xff]
    %v34 = vld [vmem:[%s2 + $0x10] sm:$0xff]
    %v35 = vld [vmem:[%s2 + $0x18] sm:$0xff]
    %v36 = vld [vmem:[%s2 + $0x20] sm:$0xff]
    %v37 = vld [vmem:[%s2 + $0x28] sm:$0xff]
    %v38 = vld [vmem:[%s2 + $0x30] sm:$0xff]
    %v39 = vld [vmem:[%s2 + $0x38] sm:$0xff]
    %41 = vset.pattern.permute.xlu0 0
    %42 = vperm.xlu0 %41, %v32
    %v43 = vpop.permute.xlu0 %42
    %46 = vset.pattern.permute.xlu0 0
    %47 = vperm.xlu0 %46, %v33
    %v48 = vpop.permute.xlu0 %47
    %51 = vset.pattern.permute.xlu0 0
    %52 = vperm.xlu0 %51, %v34
    %v53 = vpop.permute.xlu0 %52
    %56 = vset.pattern.permute.xlu0 0
    %57 = vperm.xlu0 %56, %v35
    %v58 = vpop.permute.xlu0 %57
    %61 = vset.pattern.permute.xlu0 0
    %62 = vperm.xlu0 %61, %v36
    %v63 = vpop.permute.xlu0 %62
    %66 = vset.pattern.permute.xlu0 0
    %67 = vperm.xlu0 %66, %v37
    %v68 = vpop.permute.xlu0 %67
    %71 = vset.pattern.permute.xlu0 0
    %72 = vperm.xlu0 %71, %v38
    %v73 = vpop.permute.xlu0 %72
    %76 = vset.pattern.permute.xlu0 0
    %77 = vperm.xlu0 %76, %v39
    %v78 = vpop.permute.xlu0 %77
    %v88 = vunpack.c.l.b16 %v23
    %v89 = vunpack.c.l.b16 %v24
    %v90 = vunpack.c.l.b16 %v25
    %v91 = vunpack.c.l.b16 %v26
    %v92 = vunpack.c.l.b16 %v27
    %v93 = vunpack.c.l.b16 %v28
    %v94 = vunpack.c.l.b16 %v29
    %v95 = vunpack.c.l.b16 %v30
    %v96 = vpack.c.b16 %v89, %v88
    %v97 = vpack.c.b16 %v91, %v90
    %v98 = vpack.c.b16 %v93, %v92
    %v99 = vpack.c.b16 %v95, %v94
    %vm100 = vcmask 261120
    %v102 = vsel %vm100, %v96, 0
    %v105 = vsel %vm100, %v97, 0
    %v108 = vsel %vm100, %v98, 0
    %v111 = vsel %vm100, %v99, 0
    %v114 = vsel %vm100, %v31, 0
    %116 = vmatprep.subr.bf16.mxu0 0
    %117 = vmatpush1.bf16.xpose.msra.mxu0 0
    %118 = vmatprep.subr.bf16.mxu0 0
    %119 = vmatpush1.bf16.xpose.msra.mxu0 0
    %120 = vmatprep.subr.bf16.mxu0 0
    %121 = vmatpush1.bf16.xpose.msra.mxu0 0
    %122 = vmatprep.subr.bf16.mxu0 0
    %123 = vmatpush1.bf16.xpose.msra.mxu0 0
    %124 = vmatprep.subr.bf16.mxu0 0
    %125 = vmatpush1.bf16.xpose.msra.mxu0 0
    %126 = vmatprep.subr.bf16.mxu0 0
    %127 = vmatpush1.bf16.xpose.msra.mxu0 0
    %128 = vmatprep.subr.bf16.mxu0 0
    %129 = vmatpush1.bf16.xpose.msra.mxu0 0
    %130 = vmatprep.subr.bf16.mxu0 0
    %131 = vmatpush1.bf16.xpose.msra.mxu0 %v114
    %132 = vmatprep.subr.bf16.mxu0 0
    %133 = vmatpush2.bf16.xpose.msra.mxu0 0
    %134 = vmatprep.subr.bf16.mxu0 0
    %135 = vmatpush2.bf16.xpose.msra.mxu0 0
    %136 = vmatprep.subr.bf16.mxu0 0
    %137 = vmatpush2.bf16.xpose.msra.mxu0 0
    %138 = vmatprep.subr.bf16.mxu0 0
    %139 = vmatpush2.bf16.xpose.msra.mxu0 0
    %140 = vmatprep.subr.bf16.mxu0 0
    %141 = vmatpush2.bf16.xpose.msra.mxu0 0
    %142 = vmatprep.subr.bf16.mxu0 0
    %143 = vmatpush2.bf16.xpose.msra.mxu0 0
    %144 = vmatprep.subr.bf16.mxu0 0
    %145 = vmatpush2.bf16.xpose.msra.mxu0 0
    %146 = vmatprep.subr.bf16.mxu0 0
    %147 = vmatpush2.bf16.xpose.msra.mxu0 0
    %148 = vmatprep.mubr.bf16.mxu0 0
    %149 = vmatmul.mubr.bf16.gmra.mxu0 %v102
    %v150 = vpop.f32.mrf.mxu0
    %v151 = vadd.f32 %v43, %v150
    %v152 = vpop.f32.mrf.mxu0
    %v153 = vpop.f32.mrf.mxu0
    %v154 = vadd.f32 %v48, %v153
    %v155 = vpop.f32.mrf.mxu0
    %156 = vmatprep.mubr.bf16.mxu0 0
    %157 = vmatmul.mubr.bf16.gmra.mxu0 %v105
    %v158 = vpop.f32.mrf.mxu0
    %v159 = vadd.f32 %v53, %v158
    %v160 = vpop.f32.mrf.mxu0
    %v161 = vpop.f32.mrf.mxu0
    %v162 = vadd.f32 %v58, %v161
    %v163 = vpop.f32.mrf.mxu0
    %164 = vmatprep.mubr.bf16.mxu0 0
    %165 = vmatmul.mubr.bf16.gmra.mxu0 %v108
    %v166 = vpop.f32.mrf.mxu0
    %v167 = vadd.f32 %v63, %v166
    %v168 = vpop.f32.mrf.mxu0
    %v169 = vpop.f32.mrf.mxu0
    %v170 = vadd.f32 %v68, %v169
    %v171 = vpop.f32.mrf.mxu0
    %172 = vmatprep.mubr.bf16.mxu0 0
    %173 = vmatmul.mubr.bf16.gmra.mxu0 %v111
    %v174 = vpop.f32.mrf.mxu0
    %v175 = vadd.f32 %v73, %v174
    %v176 = vpop.f32.mrf.mxu0
    %v177 = vpop.f32.mrf.mxu0
    %v178 = vadd.f32 %v78, %v177
    %v179 = vpop.f32.mrf.mxu0
    %180 = vdwg.mxu0
    %v181 = vmax.f32 %v151, 0.0
    %v182 = vmax.f32 %v154, 0.0
    %v183 = vmax.f32 %v159, 0.0
    %v184 = vmax.f32 %v162, 0.0
    %v185 = vmax.f32 %v167, 0.0
    %v186 = vmax.f32 %v170, 0.0
    %v187 = vmax.f32 %v175, 0.0
    %v188 = vmax.f32 %v178, 0.0
    %v189 = vld [vmem:[%s3] sm:$0x1]
    %s190 = sld [smem:[#allocation2]]
    %v191 = vstv %s190
    %vm192 = vcmask 523264
    %v194 = vsel %vm192, %v189, 0
    %196 = vmatprep.subr.mxu0 0.0
    %197 = vmatpush1.msra.mxu0 0.0
    %198 = vmatprep.subr.mxu0 0.0
    %199 = vmatpush1.msra.mxu0 0.0
    %200 = vmatprep.subr.mxu0 0.0
    %201 = vmatpush1.msra.mxu0 0.0
    %202 = vmatprep.subr.mxu0 0.0
    %203 = vmatpush1.msra.mxu0 0.0
    %204 = vmatprep.subr.mxu0 0.0
    %205 = vmatpush1.msra.mxu0 0.0
    %206 = vmatprep.subr.mxu0 0.0
    %207 = vmatpush1.msra.mxu0 0.0
    %208 = vmatprep.subr.mxu0 0.0
    %209 = vmatpush1.msra.mxu0 0.0
    %210 = vmatprep.subr.mxu0 0.0
    %211 = vmatpush1.msra.mxu0 0.0
    %212 = vmatprep.subr.mxu0 0.0
    %213 = vmatpush1.msra.mxu0 %v188
    %214 = vmatprep.subr.mxu0 0.0
    %215 = vmatpush1.msra.mxu0 %v187
    %216 = vmatprep.subr.mxu0 0.0
    %217 = vmatpush1.msra.mxu0 %v186
    %218 = vmatprep.subr.mxu0 0.0
    %219 = vmatpush1.msra.mxu0 %v185
    %220 = vmatprep.subr.mxu0 0.0
    %221 = vmatpush1.msra.mxu0 %v184
    %222 = vmatprep.subr.mxu0 0.0
    %223 = vmatpush1.msra.mxu0 %v183
    %224 = vmatprep.subr.mxu0 0.0
    %225 = vmatpush1.msra.mxu0 %v182
    %226 = vmatprep.subr.mxu0 0.0
    %227 = vmatpush1.msra.mxu0 %v181
    %228 = vmatprep.subr.mxu0 0.0
    %229 = vmatpush2.msra.mxu0 0.0
    %230 = vmatprep.subr.mxu0 0.0
    %231 = vmatpush2.msra.mxu0 0.0
    %232 = vmatprep.subr.mxu0 0.0
    %233 = vmatpush2.msra.mxu0 0.0
    %234 = vmatprep.subr.mxu0 0.0
    %235 = vmatpush2.msra.mxu0 0.0
    %236 = vmatprep.subr.mxu0 0.0
    %237 = vmatpush2.msra.mxu0 0.0
    %238 = vmatprep.subr.mxu0 0.0
    %239 = vmatpush2.msra.mxu0 0.0
    %240 = vmatprep.subr.mxu0 0.0
    %241 = vmatpush2.msra.mxu0 0.0
    %242 = vmatprep.subr.mxu0 0.0
    %243 = vmatpush2.msra.mxu0 0.0
    %244 = vmatprep.subr.mxu0 0.0
    %245 = vmatpush2.msra.mxu0 0.0
    %246 = vmatprep.subr.mxu0 0.0
    %247 = vmatpush2.msra.mxu0 0.0
    %248 = vmatprep.subr.mxu0 0.0
    %249 = vmatpush2.msra.mxu0 0.0
    %250 = vmatprep.subr.mxu0 0.0
    %251 = vmatpush2.msra.mxu0 0.0
    %252 = vmatprep.subr.mxu0 0.0
    %253 = vmatpush2.msra.mxu0 0.0
    %254 = vmatprep.subr.mxu0 0.0
    %255 = vmatpush2.msra.mxu0 0.0
    %256 = vmatprep.subr.mxu0 0.0
    %257 = vmatpush2.msra.mxu0 0.0
    %258 = vmatprep.subr.mxu0 0.0
    %259 = vmatpush2.msra.mxu0 0.0
    %260 = vmatprep.mubr.f32.mxu0 0.0
    %261 = vmatmul.mubr.f32.gmra.mxu0 %v194
    %v262 = vpop.f32.mrf.mxu0
    %v263 = vadd.f32 %v191, %v262
    %v264 = vpop.f32.mrf.mxu0
    %265 = vdwg.mxu0
    %v266 = vxor.u32 %v263, 2147483648
    %v267 = vmul.f32 %v266, 1.442695
    %v268 = vpow.pop %v267
    %v269 = vadd.f32 %v268, 1.0
    %v270 = vrcp.pop %v269
    %v271 = vmul.f32 1.0, %v270
    %vm272 = vcmask 57344
    %273 = vst.msk [vmem:[#allocation3] sm:$0x1] %vm272, %v271
    // Predicated region
    $region22: #{tpu_custom_call.1} parent=1 // pred_check
      _
    $region23: #{tpu_custom_call.1} parent=1 // pred_check_branch
      %275 = sbr.rel (0) target = $region25
    $region24: #{tpu_custom_call.1} parent=1 // pred_region
      %s277 = ssub.s32 16, 16
      %278 = vsyncadd [#allocation4], %s277
      %s280 = sshll.u32 [#allocation3], 4
      %s281 = int_to_ptr.vmem [resolvable:$true] %s280
      %283 = dma.vmem_to_hbm [thread:$0]  %s281, 16, %s5, [#allocation4]
    $region25: #{tpu_custom_call.1} parent=1 // pred_fallthru
      _
    // Predicated region
    $region26: #{tpu_custom_call.1} parent=1 // pred_check
      _
    $region27: #{tpu_custom_call.1} parent=1 // pred_check_branch
      %285 = sbr.rel (0) target = $region29
    $region28: #{tpu_custom_call.1} parent=1 // pred_region
      %286 = dma.done [#allocation4], 16
    $region29: #{tpu_custom_call.1} parent=1 // pred_fallthru
      _
    %287 = vsyncpa [#allocation4], 1

</llo_original>
